<compile_context>
chip_gen: v7x
topology: tpu7x:2x2x1
jax: 0.10.0
libtpu: 0.0.40
codegen_flags: <defaults>
</compile_context>

<pallas_src>
import functools

import jax
import jax.numpy as jnp
from jax.experimental import pallas as pl
from jax.experimental.pallas import tpu as pltpu

LANE = 128
MAX_BLOCK_ROWS = 4096   # 4096 x 128 x 4B = 2 MiB per f32 input block


def _dice_kernel(x_ref, t_ref, o_ref, *, threshold, n_valid, block_rows, needs_mask):
    """Accumulates per-lane partial sums for the dice reduction.

    x_ref, t_ref : (block_rows, LANE) VMEM tiles (native input dtype)
    o_ref        : (3, 8, LANE) f32 VMEM output, resident across the grid:
                   o[0] += sum(bin(x) * t), o[1] += sum(bin(x)), o[2] += sum(t*t)
    """
    i = pl.program_id(0)

    @pl.when(i == 0)
    def _():
        o_ref[...] = jnp.zeros_like(o_ref)

    x = x_ref[...].astype(jnp.float32)
    t = t_ref[...].astype(jnp.float32)

    b = x > threshold                                  # _binarize_pred

    if needs_mask:
        # Out-of-bounds parts of boundary blocks / lane padding are undefined,
        # so mask every element against the true (unpadded) element count.
        row = jax.lax.broadcasted_iota(jnp.int32, (block_rows, LANE), 0)
        lane = jax.lax.broadcasted_iota(jnp.int32, (block_rows, LANE), 1)
        elem = (i * block_rows + row) * LANE + lane
        valid = elem < n_valid
        b = jnp.logical_and(b, valid)
        t = jnp.where(valid, t, 0.0)

    inter = jnp.where(b, t, 0.0)                       # b * t      (b is 0/1)
    count = b.astype(jnp.float32)                      # b * b == b (b is 0/1)
    tt = t * t                                         # target ** 2

    # Reshape groups whole (8,128) vregs, so the axis-0 reduction is plain
    # VPU adds (no XLU cross-lane reduce, no SMEM scalar dependency chain).
    r = block_rows // 8
    o_ref[0, :, :] += inter.reshape(r, 8, LANE).sum(axis=0)
    o_ref[1, :, :] += count.reshape(r, 8, LANE).sum(axis=0)
    o_ref[2, :, :] += tt.reshape(r, 8, LANE).sum(axis=0)


def dice_loss(pred, target, *, threshold=0.5, reduction="sum", return_score=False):
    """Pallas implementation of DiceLoss.forward (default: reduction='sum')."""
    assert pred.shape == target.shape
    xf = jnp.reshape(pred, (-1,))
    tf = jnp.reshape(target, (-1,))
    n = xf.shape[0]
    assert n > 0

    # Flat length must be a multiple of LANE to view it as (rows, LANE); also
    # guarantee at least one 16-row tile (16 rows covers f32 and bf16 tiling).
    padded = max(16 * LANE, ((n + LANE - 1) // LANE) * LANE)
    rows = padded // LANE
    block_rows = min(MAX_BLOCK_ROWS, (rows // 16) * 16)   # multiple of 16
    num_blocks = int(pl.cdiv(rows, block_rows))
    needs_mask = (num_blocks * block_rows * LANE) != n

    pad = padded - n
    if pad:
        # Pad values are never read: the kernel masks against n_valid.
        xf = jnp.pad(xf, (0, pad))
        tf = jnp.pad(tf, (0, pad))
    x2d = xf.reshape(rows, LANE)
    t2d = tf.reshape(rows, LANE)

    partials = pl.pallas_call(
        functools.partial(
            _dice_kernel,
            threshold=float(threshold),
            n_valid=n,
            block_rows=block_rows,
            needs_mask=needs_mask,
        ),
        out_shape=jax.ShapeDtypeStruct((3, 8, LANE), jnp.float32),
        grid_spec=pltpu.PrefetchScalarGridSpec(
            num_scalar_prefetch=0,
            grid=(num_blocks,),
            in_specs=[
                pl.BlockSpec((block_rows, LANE), lambda i: (i, 0)),
                pl.BlockSpec((block_rows, LANE), lambda i: (i, 0)),
            ],
            out_specs=pl.BlockSpec((3, 8, LANE), lambda i: (0, 0, 0)),
        ),
        compiler_params=pltpu.CompilerParams(
            dimension_semantics=("arbitrary",),   # reduction axis (output resident)
            vmem_limit_bytes=32 << 20,            # room for 2x2 double-buffered blocks
        ),
    )(x2d, t2d)

    sums = jnp.sum(partials, axis=(1, 2))             # tiny (3,) reduce in XLA
    # Matches the PyTorch reference exactly (no smoothing eps): an all-empty
    # prediction + target pair yields inf/nan, same as the reference.
    dice_score = 2.0 * sums[0] / (sums[1] + sums[2])
    if return_score:
        return dice_score
    dice_l = 1.0 - dice_score
    # reduction 'mean'/'sum'/other on a 0-d loss are all the identity
    return dice_l


def _dice_loss_ref(pred, target, threshold=0.5):
    b = (pred > threshold).astype(jnp.float32)
    t = target.astype(jnp.float32)
    score = 2.0 * jnp.sum(b * t) / (jnp.sum(b * b) + jnp.sum(t * t))
    return 1.0 - score


if __name__ == "__main__":
    key = jax.random.PRNGKey(0)
    k1, k2 = jax.random.split(key)

    # NCHW inputs, small shapes (aligned case: no masking needed)
    x = jax.random.uniform(k1, (2, 4, 16, 16), dtype=jnp.float32)
    tgt = (jax.random.uniform(k2, (2, 4, 16, 16)) > 0.5).astype(jnp.float32)
    loss = dice_loss(x, tgt, threshold=0.5, reduction="sum")
    jax.block_until_ready(loss)
    ref = _dice_loss_ref(x, tgt, threshold=0.5)
    assert jnp.allclose(loss, ref, rtol=1e-5, atol=1e-5), (loss, ref)

    # Non-aligned shape exercises the in-kernel tail-mask path.
    k3, k4 = jax.random.split(k2)
    x2 = jax.random.uniform(k3, (2, 3, 15, 17), dtype=jnp.float32)
    t2 = (jax.random.uniform(k4, (2, 3, 15, 17)) > 0.5).astype(jnp.float32)
    loss2 = dice_loss(x2, t2, threshold=0.5)
    jax.block_until_ready(loss2)
    ref2 = _dice_loss_ref(x2, t2, threshold=0.5)
    assert jnp.allclose(loss2, ref2, rtol=1e-5, atol=1e-5), (loss2, ref2)

    print("KERNEL_OK")
</pallas_src>

<mosaic_0001>
module attributes {stable_mosaic.version = 11 : i64} {
  func.func @_dice_kernel(%arg0: i32, %arg1: memref<16x128xf32, #tpu.memory_space<vmem>>, %arg2: memref<16x128xf32, #tpu.memory_space<vmem>>, %arg3: memref<3x8x128xf32, #tpu.memory_space<vmem>>) attributes {dimension_semantics = [#tpu.dimension_semantics<arbitrary>], iteration_bounds = array<i64: 1>, scalar_prefetch = 0 : i64, scratch_operands = 0 : i64, tpu.core_type = #tpu.core_type<tc>, window_params = [{transform_indices = @transform_0, window_bounds = array<i64: 16, 128>}, {transform_indices = @transform_1, window_bounds = array<i64: 16, 128>}, {pipeline_mode = #tpu.pipeline_mode<synchronous>, transform_indices = @transform_2, window_bounds = array<i64: 3, 8, 128>}]} {
    %c0_i32 = arith.constant 0 : i32
    %0 = arith.cmpi eq, %arg0, %c0_i32 : i32
    %1 = arith.extui %0 : i1 to i32
    %c0_i32_0 = arith.constant 0 : i32
    %2 = arith.cmpi ne, %1, %c0_i32_0 : i32
    scf.if %2 {
      %cst_24 = arith.constant 0.000000e+00 : f32
      %36 = vector.broadcast %cst_24 : f32 to vector<3x8x128xf32>
      %c0_25 = arith.constant 0 : index
      %c0_26 = arith.constant 0 : index
      %c0_27 = arith.constant 0 : index
      %37 = vector.load %arg3[%c0_25, %c0_26, %c0_27] : memref<3x8x128xf32, #tpu.memory_space<vmem>>, vector<3x8x128xf32>
      tpu.vector_store %arg3[%c0_25, %c0_26, %c0_27], %36 {strides = array<i32>} : memref<3x8x128xf32, #tpu.memory_space<vmem>>, vector<3x8x128xf32>,
    } else {
    }
    %c0 = arith.constant 0 : index
    %c0_1 = arith.constant 0 : index
    %3 = vector.load %arg1[%c0, %c0_1] : memref<16x128xf32, #tpu.memory_space<vmem>>, vector<16x128xf32>
    %c0_2 = arith.constant 0 : index
    %c0_3 = arith.constant 0 : index
    %4 = vector.load %arg2[%c0_2, %c0_3] : memref<16x128xf32, #tpu.memory_space<vmem>>, vector<16x128xf32>
    %cst = arith.constant 5.000000e-01 : f32
    %5 = vector.broadcast %cst : f32 to vector<16x128xf32>
    %6 = arith.cmpf ogt, %3, %5 : vector<16x128xf32>
    %cst_4 = arith.constant 0.000000e+00 : f32
    %7 = vector.broadcast %cst_4 : f32 to vector<16x128xf32>
    %8 = arith.select %6, %4, %7 : vector<16x128xi1>, vector<16x128xf32>
    %9 = arith.extui %6 : vector<16x128xi1> to vector<16x128xi32>
    %10 = arith.sitofp %9 : vector<16x128xi32> to vector<16x128xf32>
    %11 = arith.mulf %4, %4 : vector<16x128xf32>
    %c0_5 = arith.constant 0 : index
    %c0_6 = arith.constant 0 : index
    %c0_7 = arith.constant 0 : index
    %12 = vector.load %arg3[%c0_5, %c0_6, %c0_7] : memref<3x8x128xf32, #tpu.memory_space<vmem>>, vector<1x8x128xf32>
    %13 = vector.shape_cast %12 : vector<1x8x128xf32> to vector<8x128xf32>
    %14 = vector.shape_cast %8 : vector<16x128xf32> to vector<2x8x128xf32>
    %cst_8 = arith.constant dense<0.000000e+00> : vector<8x128xf32>
    %15 = vector.multi_reduction <add>, %14, %cst_8 [0] : vector<2x8x128xf32> to vector<8x128xf32>
    %16 = arith.addf %13, %15 : vector<8x128xf32>
    %c0_9 = arith.constant 0 : index
    %c0_10 = arith.constant 0 : index
    %c0_11 = arith.constant 0 : index
    %17 = vector.load %arg3[%c0_9, %c0_10, %c0_11] : memref<3x8x128xf32, #tpu.memory_space<vmem>>, vector<1x8x128xf32>
    %18 = vector.shape_cast %17 : vector<1x8x128xf32> to vector<8x128xf32>
    %19 = vector.shape_cast %16 : vector<8x128xf32> to vector<1x8x128xf32>
    tpu.vector_store %arg3[%c0_9, %c0_10, %c0_11], %19 {strides = array<i32>} : memref<3x8x128xf32, #tpu.memory_space<vmem>>, vector<1x8x128xf32>,
    %c1 = arith.constant 1 : index
    %c0_12 = arith.constant 0 : index
    %c0_13 = arith.constant 0 : index
    %20 = vector.load %arg3[%c1, %c0_12, %c0_13] : memref<3x8x128xf32, #tpu.memory_space<vmem>>, vector<1x8x128xf32>
    %21 = vector.shape_cast %20 : vector<1x8x128xf32> to vector<8x128xf32>
    %22 = vector.shape_cast %10 : vector<16x128xf32> to vector<2x8x128xf32>
    %cst_14 = arith.constant dense<0.000000e+00> : vector<8x128xf32>
    %23 = vector.multi_reduction <add>, %22, %cst_14 [0] : vector<2x8x128xf32> to vector<8x128xf32>
    %24 = arith.addf %21, %23 : vector<8x128xf32>
    %c1_15 = arith.constant 1 : index
    %c0_16 = arith.constant 0 : index
    %c0_17 = arith.constant 0 : index
    %25 = vector.load %arg3[%c1_15, %c0_16, %c0_17] : memref<3x8x128xf32, #tpu.memory_space<vmem>>, vector<1x8x128xf32>
    %26 = vector.shape_cast %25 : vector<1x8x128xf32> to vector<8x128xf32>
    %27 = vector.shape_cast %24 : vector<8x128xf32> to vector<1x8x128xf32>
    tpu.vector_store %arg3[%c1_15, %c0_16, %c0_17], %27 {strides = array<i32>} : memref<3x8x128xf32, #tpu.memory_space<vmem>>, vector<1x8x128xf32>,
    %c2 = arith.constant 2 : index
    %c0_18 = arith.constant 0 : index
    %c0_19 = arith.constant 0 : index
    %28 = vector.load %arg3[%c2, %c0_18, %c0_19] : memref<3x8x128xf32, #tpu.memory_space<vmem>>, vector<1x8x128xf32>
    %29 = vector.shape_cast %28 : vector<1x8x128xf32> to vector<8x128xf32>
    %30 = vector.shape_cast %11 : vector<16x128xf32> to vector<2x8x128xf32>
    %cst_20 = arith.constant dense<0.000000e+00> : vector<8x128xf32>
    %31 = vector.multi_reduction <add>, %30, %cst_20 [0] : vector<2x8x128xf32> to vector<8x128xf32>
    %32 = arith.addf %29, %31 : vector<8x128xf32>
    %c2_21 = arith.constant 2 : index
    %c0_22 = arith.constant 0 : index
    %c0_23 = arith.constant 0 : index
    %33 = vector.load %arg3[%c2_21, %c0_22, %c0_23] : memref<3x8x128xf32, #tpu.memory_space<vmem>>, vector<1x8x128xf32>
    %34 = vector.shape_cast %33 : vector<1x8x128xf32> to vector<8x128xf32>
    %35 = vector.shape_cast %32 : vector<8x128xf32> to vector<1x8x128xf32>
    tpu.vector_store %arg3[%c2_21, %c0_22, %c0_23], %35 {strides = array<i32>} : memref<3x8x128xf32, #tpu.memory_space<vmem>>, vector<1x8x128xf32>,
    return
  }
  func.func @transform_0(%arg0: i32) -> (i32, i32) {
    %c0_i32 = arith.constant 0 : i32
    %c0_i32_0 = arith.constant 0 : i32
    return %arg0, %c0_i32 : i32, i32
  }
  func.func @transform_1(%arg0: i32) -> (i32, i32) {
    %c0_i32 = arith.constant 0 : i32
    %c0_i32_0 = arith.constant 0 : i32
    return %arg0, %c0_i32 : i32, i32
  }
  func.func @transform_2(%arg0: i32) -> (i32, i32, i32) {
    %c0_i32 = arith.constant 0 : i32
    %c0_i32_0 = arith.constant 0 : i32
    %c0_i32_1 = arith.constant 0 : i32
    %c0_i32_2 = arith.constant 0 : i32
    return %c0_i32, %c0_i32_0, %c0_i32_1 : i32, i32, i32
  }
}

</mosaic_0001>

<llo_original>
// kernel: tpu_custom_call.1
$region0: #{tpu_custom_call.1}
  #allocation0 [shape = 'u32[]', space=smem, size = 0x4, offset = 0x4, fixed_abs, tag = 'smem constant byte address 0x4 - core index']
  #allocation1 [shape = 'u32[144,128]{1,0:T(1,128)}', space=vmem, size = 0x12000, scoped, tag = 'internal scratch']
  %s0 = inlined_call_operand.hbm [shape: f32[16,128], index: 0, kind: input, shape index: {}]
  %s1 = inlined_call_operand.hbm [shape: f32[16,128], index: 1, kind: input, shape index: {}]
  %s2 = inlined_call_operand.hbm [shape: f32[3,8,128], index: 2, kind: output, shape index: {}]
  %s3 = sld [smem:[#allocation0]]
  $region30: #{tpu_custom_call.1} parent=0
    _
  %s5 = ssub.s32 1, %s3
  %s6 = scalar_select 0, %s5, %s3
  $region1: #{tpu_custom_call.1} parent=0
    #allocation2 [shape = 'u8[8192]{0}', space=vmem, size = 0x2000, scoped, tag = 'input window, operand 0, single buffered']
    #allocation3 [shape = 's32[1]{0}', space=sflag, size = 0x4, scoped, tag = 'scoped memory for tpu_custom_call.1']
    #allocation4 [shape = 's32[1]{0}', space=sflag, size = 0x4, scoped, tag = 'scoped memory for tpu_custom_call.1']
    #allocation5 [shape = 'u8[8192]{0}', space=vmem, size = 0x2000, scoped, tag = 'input window, operand 1, single buffered']
    #allocation6 [shape = 's32[1]{0}', space=sflag, size = 0x4, scoped, tag = 'scoped memory for tpu_custom_call.1']
    #allocation7 [shape = 'u8[12288]{0}', space=vmem, size = 0x3000, scoped, tag = 'output window, operand 0, single buffered']
    %7 = vsyncpa [#allocation3], 0
    %8 = vsyncpa [#allocation6], 0
    %9 = vsyncpa [#allocation4], 0
    // Predicated region
    $region2: #{tpu_custom_call.1} parent=1 // pred_check
      _
    $region3: #{tpu_custom_call.1} parent=1 // pred_check_branch
      %11 = sbr.rel (0) target = $region5
    $region4: #{tpu_custom_call.1} parent=1 // pred_region
      %s13 = ssub.s32 256, 256
      %14 = vsyncadd [#allocation3], %s13
      %s15 = sshll.u32 [#allocation2], 4
      %s16 = int_to_ptr.vmem [resolvable:$true] %s15
      %21 = dma.hbm_to_vmem [thread:$0]  %s0, 256, %s16, [#allocation3], 128, 128, 8
    $region5: #{tpu_custom_call.1} parent=1 // pred_fallthru
      _
    // Predicated region
    $region6: #{tpu_custom_call.1} parent=1 // pred_check
      _
    $region7: #{tpu_custom_call.1} parent=1 // pred_check_branch
      %23 = sbr.rel (0) target = $region9
    $region8: #{tpu_custom_call.1} parent=1 // pred_region
      %s25 = ssub.s32 256, 256
      %26 = vsyncadd [#allocation6], %s25
      %s27 = sshll.u32 [#allocation5], 4
      %s28 = int_to_ptr.vmem [resolvable:$true] %s27
      %33 = dma.hbm_to_vmem [thread:$0]  %s1, 256, %s28, [#allocation6], 128, 128, 8
    $region9: #{tpu_custom_call.1} parent=1 // pred_fallthru
      _
    // Predicated region
    $region10: #{tpu_custom_call.1} parent=1 // pred_check
      _
    $region11: #{tpu_custom_call.1} parent=1 // pred_check_branch
      %35 = sbr.rel (0) target = $region13
    $region12: #{tpu_custom_call.1} parent=1 // pred_region
      %36 = dma.done [#allocation3], 256
    $region13: #{tpu_custom_call.1} parent=1 // pred_fallthru
      _
    // Predicated region
    $region14: #{tpu_custom_call.1} parent=1 // pred_check
      _
    $region15: #{tpu_custom_call.1} parent=1 // pred_check_branch
      %38 = sbr.rel (0) target = $region17
    $region16: #{tpu_custom_call.1} parent=1 // pred_region
      %39 = dma.done [#allocation6], 256
    $region17: #{tpu_custom_call.1} parent=1 // pred_fallthru
      _
    %p40 = scmp.eq.s32.totalorder 0, 0
    // Predicated region
    $region18: #{tpu_custom_call.1} parent=1 // pred_check
      %p41 = pneg %p40
    $region19: #{tpu_custom_call.1} parent=1 // pred_check_branch
      %43 = sbr.rel (%p41) target = $region21
    $region20: #{tpu_custom_call.1} parent=1 // pred_region
      %44 = vst [vmem:[#allocation7] sm:$0xff] 0.0
      %45 = vst [vmem:[#allocation7 + $0x8] sm:$0xff] 0.0
      %46 = vst [vmem:[#allocation7 + $0x10] sm:$0xff] 0.0
    $region21: #{tpu_custom_call.1} parent=1 // pred_fallthru
      _
    %v47 = vld [vmem:[#allocation2] sm:$0xff]
    %v48 = vld [vmem:[#allocation2 + $0x8] sm:$0xff]
    %v49 = vld [vmem:[#allocation5] sm:$0xff]
    %v50 = vld [vmem:[#allocation5 + $0x8] sm:$0xff]
    %vm51 = vcmp.gt.f32.partialorder %v47, 0.5
    %vm52 = vcmp.gt.f32.partialorder %v48, 0.5
    %v53 = vsel %vm51, %v49, 0.0
    %v54 = vsel %vm52, %v50, 0.0
    %v55 = vsel %vm51, 1, 0
    %v56 = vsel %vm52, 1, 0
    %v57 = vcvt.s32.f32 %v55
    %v58 = vcvt.s32.f32 %v56
    %v59 = vmul.f32 %v49, %v49
    %v60 = vmul.f32 %v50, %v50
    %v61 = vld [vmem:[#allocation7] sm:$0xff]
    %v62 = vadd.f32 %v53, %v54
    %v63 = vadd.f32 %v61, %v62
    %64 = vst [vmem:[#allocation7] sm:$0xff] %v63
    %s65 = scalar_lea.vmem [#allocation7], 8
    %v66 = vld [vmem:[%s65] sm:$0xff]
    %v67 = vadd.f32 %v57, %v58
    %v68 = vadd.f32 %v66, %v67
    %69 = vst [vmem:[%s65] sm:$0xff] %v68
    %s70 = scalar_lea.vmem [#allocation7], 16
    %v71 = vld [vmem:[%s70] sm:$0xff]
    %v72 = vadd.f32 %v59, %v60
    %v73 = vadd.f32 %v71, %v72
    %74 = vst [vmem:[%s70] sm:$0xff] %v73
    // Predicated region
    $region22: #{tpu_custom_call.1} parent=1 // pred_check
      _
    $region23: #{tpu_custom_call.1} parent=1 // pred_check_branch
      %76 = sbr.rel (0) target = $region25
    $region24: #{tpu_custom_call.1} parent=1 // pred_region
      %s78 = ssub.s32 384, 384
      %79 = vsyncadd [#allocation4], %s78
      %s80 = sshll.u32 [#allocation7], 4
      %s81 = int_to_ptr.vmem [resolvable:$true] %s80
      %86 = dma.vmem_to_hbm [thread:$0]  %s81, 384, %s2, [#allocation4], 128, 128, 8
    $region25: #{tpu_custom_call.1} parent=1 // pred_fallthru
      _
    // Predicated region
    $region26: #{tpu_custom_call.1} parent=1 // pred_check
      _
    $region27: #{tpu_custom_call.1} parent=1 // pred_check_branch
      %88 = sbr.rel (0) target = $region29
    $region28: #{tpu_custom_call.1} parent=1 // pred_region
      %89 = dma.done [#allocation4], 384
    $region29: #{tpu_custom_call.1} parent=1 // pred_fallthru
      _
    %90 = vsyncpa [#allocation3], 1
    %91 = vsyncpa [#allocation6], 1
    %92 = vsyncpa [#allocation4], 1

</llo_original>
